<compile_context>
chip_gen: v6e
topology: v6e:2x2x1
jax: 0.10.0
libtpu: 0.0.40
codegen_flags: <defaults>
</compile_context>

<pallas_src>
import functools

import jax
import jax.numpy as jnp
from jax.experimental import pallas as pl
from jax.experimental.pallas import tpu as pltpu


def _round_up(x, m):
    return (x + m - 1) // m * m


def _gemm_bn_lrelu_kernel(a_ref, b_ref, shift_ref, o_ref, acc_ref, *,
                          negative_slope):
    """One (tm, tn) output tile of the fused conv: GEMM + BN shift + LeakyReLU.

    a_ref     : (tm, tk)  bf16 im2col rows
    b_ref     : (tk, tn)  bf16 conv weights (BN scale pre-folded)
    shift_ref : (1,  tn)  f32 folded BN shift
    o_ref     : (tm, tn)  output tile
    acc_ref   : (tm, tn)  f32 accumulator (resident across the K grid axis)
    """
    @pl.when(pl.program_id(2) == 0)
    def _():
        acc_ref[...] = jnp.zeros_like(acc_ref)

    acc_ref[...] += jnp.dot(a_ref[...], b_ref[...],
                            preferred_element_type=jnp.float32)

    @pl.when(pl.program_id(2) == pl.num_programs(2) - 1)
    def _():
        y = acc_ref[...] + shift_ref[...]
        o_ref[...] = jnp.where(y > 0, y, negative_slope * y).astype(o_ref.dtype)


@functools.partial(jax.jit,
                   static_argnames=("stride", "padding", "eps", "negative_slope"))
def convolutional_layer(x_nchw, weight_oihw, gamma, beta, run_mean, run_var,
                        *, stride, padding, eps=1e-5, negative_slope=0.1):
    """Forward of ConvolutionalLayer. x_nchw: (N, Cin, H, W) -> (N, Cout, Ho, Wo)."""
    n, c_in, h, w = x_nchw.shape
    c_out, _, kh, kw = weight_oihw.shape
    h_out = (h + 2 * padding - kh) // stride + 1
    w_out = (w + 2 * padding - kw) // stride + 1

    # ---- BN folding (inference semantics) -----------------------------------
    inv_std = 1.0 / jnp.sqrt(run_var.astype(jnp.float32) + eps)
    scale = gamma.astype(jnp.float32) * inv_std                       # (Cout,)
    shift = beta.astype(jnp.float32) - run_mean.astype(jnp.float32) * scale

    # ---- weight: OIHW -> (kh*kw*Cin, Cout), BN scale folded in --------------
    w_hwio = jnp.transpose(weight_oihw.astype(jnp.float32), (2, 3, 1, 0))
    w2d = (w_hwio * scale[None, None, None, :]).reshape(kh * kw * c_in, c_out)

    # ---- im2col in the wrapper (single XLA fusion), channels-last, bf16 -----
    x_nhwc = jnp.transpose(x_nchw, (0, 2, 3, 1)).astype(jnp.bfloat16)
    x_pad = jnp.pad(x_nhwc,
                    ((0, 0), (padding, padding), (padding, padding), (0, 0)))
    cols = []
    for i in range(kh):
        for j in range(kw):
            cols.append(x_pad[:, i:i + stride * (h_out - 1) + 1:stride,
                              j:j + stride * (w_out - 1) + 1:stride, :])
    a = jnp.concatenate(cols, axis=-1)            # (N, Ho, Wo, kh*kw*Cin)

    k = kh * kw * c_in
    m = n * h_out * w_out
    a = a.reshape(m, k)

    # ---- tile selection ------------------------------------------------------
    # Output channels: lane-dense stores; fill the 256-wide MXU when possible.
    tn = 256 if c_out > 128 else 128
    c_out_pad = _round_up(c_out, tn)
    nn = c_out_pad // tn

    # Rows: up to 512, multiple of 16 (bf16 sublane packing), but never let the
    # parallel grid collapse below 2 programs (v7x has 2 TensorCores).
    m16 = _round_up(m, 16)
    tm = 512
    while tm > 16 and (tm // 2 >= m16 or nn * pl.cdiv(m16, tm) < 2):
        tm //= 2
    m_pad = _round_up(m16, tm)
    nm = m_pad // tm

    # Contraction: use the full K as a single block when small (no K padding of
    # A at all); otherwise tile K (multiple of 128, <= 2048) with an f32
    # accumulator so huge Cin*kh*kw never exceeds VMEM.
    if k <= 2048:
        tk, k_pad, nk = k, k, 1
    else:
        q = _round_up(k, 128) // 128
        nk = -(-q // 16)                       # ceil: keeps tk <= 2048
        tk = 128 * (-(-q // nk))
        k_pad = nk * tk

    a = jnp.pad(a, ((0, m_pad - m), (0, k_pad - k)))
    b = jnp.pad(w2d, ((0, k_pad - k), (0, c_out_pad - c_out))).astype(jnp.bfloat16)
    shift_p = jnp.pad(shift.reshape(1, c_out), ((0, 0), (0, c_out_pad - c_out)))

    kernel = functools.partial(_gemm_bn_lrelu_kernel,
                               negative_slope=negative_slope)

    out_dtype = x_nchw.dtype
    flops = 2 * m_pad * k_pad * c_out_pad
    bytes_accessed = (nn * m_pad * k_pad * 2 + nm * k_pad * c_out_pad * 2
                      + m_pad * c_out_pad * jnp.dtype(out_dtype).itemsize)

    out = pl.pallas_call(
        kernel,
        out_shape=jax.ShapeDtypeStruct((m_pad, c_out_pad), out_dtype),
        grid_spec=pltpu.PrefetchScalarGridSpec(
            num_scalar_prefetch=0,
            grid=(nm, nn, nk),
            in_specs=[
                pl.BlockSpec((tm, tk), lambda i, j, kk: (i, kk)),
                pl.BlockSpec((tk, tn), lambda i, j, kk: (kk, j)),
                pl.BlockSpec((1, tn), lambda i, j, kk: (0, j)),
            ],
            out_specs=pl.BlockSpec((tm, tn), lambda i, j, kk: (i, j)),
            scratch_shapes=[pltpu.VMEM((tm, tn), jnp.float32)],
        ),
        compiler_params=pltpu.CompilerParams(
            dimension_semantics=("parallel", "parallel", "arbitrary"),
            vmem_limit_bytes=48 * 1024 * 1024,
        ),
        cost_estimate=pl.CostEstimate(flops=flops, transcendentals=0,
                                      bytes_accessed=bytes_accessed),
    )(a, b, shift_p)

    out = out[:m, :c_out].reshape(n, h_out, w_out, c_out)
    return jnp.transpose(out, (0, 3, 1, 2))       # back to NCHW (module contract)


def _reference(x_nchw, weight_oihw, gamma, beta, run_mean, run_var,
               *, stride, padding, eps=1e-5, negative_slope=0.1):
    y = jax.lax.conv_general_dilated(
        x_nchw, weight_oihw,
        window_strides=(stride, stride),
        padding=[(padding, padding), (padding, padding)],
        dimension_numbers=("NCHW", "OIHW", "NCHW"))
    inv_std = 1.0 / jnp.sqrt(run_var + eps)
    y = (y - run_mean[None, :, None, None]) * inv_std[None, :, None, None]
    y = y * gamma[None, :, None, None] + beta[None, :, None, None]
    return jnp.where(y > 0, y, negative_slope * y)


if __name__ == "__main__":
    # Module config: ConvolutionalLayer(in=4, out=8, kernel=3, stride=1, pad=1)
    N, C_IN, H, W = 2, 4, 16, 16
    C_OUT, K, STRIDE, PAD = 8, 3, 1, 1

    key = jax.random.PRNGKey(0)
    kx, kw_, kg, kb, km, kv = jax.random.split(key, 6)

    x = jax.random.normal(kx, (N, C_IN, H, W), dtype=jnp.float32)
    weight = jax.random.normal(kw_, (C_OUT, C_IN, K, K), dtype=jnp.float32) * 0.1
    gamma = jax.random.normal(kg, (C_OUT,), dtype=jnp.float32) * 0.1 + 1.0
    beta = jax.random.normal(kb, (C_OUT,), dtype=jnp.float32) * 0.1
    run_mean = jax.random.normal(km, (C_OUT,), dtype=jnp.float32) * 0.1
    run_var = jax.random.uniform(kv, (C_OUT,), dtype=jnp.float32,
                                 minval=0.5, maxval=1.5)

    out = convolutional_layer(x, weight, gamma, beta, run_mean, run_var,
                              stride=STRIDE, padding=PAD)
    out = jax.block_until_ready(out)

    ref = _reference(x, weight, gamma, beta, run_mean, run_var,
                     stride=STRIDE, padding=PAD)
    assert out.shape == (N, C_OUT, H, W)
    assert jnp.allclose(out, ref, rtol=1e-2, atol=1e-2)

    print("KERNEL_OK")
</pallas_src>

<mosaic_0001>
module attributes {stable_mosaic.version = 11 : i64} {
  func.func @_gemm_bn_lrelu_kernel(%arg0: i32, %arg1: i32, %arg2: i32, %arg3: memref<256x36xbf16, #tpu.memory_space<vmem>>, %arg4: memref<36x128xbf16, #tpu.memory_space<vmem>>, %arg5: memref<1x128xf32, #tpu.memory_space<vmem>>, %arg6: memref<256x128xf32, #tpu.memory_space<vmem>>, %arg7: memref<256x128xf32, #tpu.memory_space<vmem>>) attributes {dimension_semantics = [#tpu.dimension_semantics<parallel>, #tpu.dimension_semantics<parallel>, #tpu.dimension_semantics<arbitrary>], iteration_bounds = array<i64: 2, 1, 1>, scalar_prefetch = 0 : i64, scratch_operands = 1 : i64, tpu.core_type = #tpu.core_type<tc>, window_params = [{transform_indices = @transform_0, window_bounds = array<i64: 256, 36>}, {transform_indices = @transform_1, window_bounds = array<i64: 36, 128>}, {transform_indices = @transform_2, window_bounds = array<i64: 1, 128>}, {transform_indices = @transform_3, window_bounds = array<i64: 256, 128>}]} {
    %c0_i32 = arith.constant 0 : i32
    %0 = arith.cmpi eq, %arg2, %c0_i32 : i32
    %1 = arith.extui %0 : i1 to i32
    %c0_i32_0 = arith.constant 0 : i32
    %2 = arith.cmpi ne, %1, %c0_i32_0 : i32
    scf.if %2 {
      %cst_10 = arith.constant 0.000000e+00 : f32
      %12 = vector.broadcast %cst_10 : f32 to vector<256x128xf32>
      %c0_11 = arith.constant 0 : index
      %c0_12 = arith.constant 0 : index
      %13 = vector.load %arg7[%c0_11, %c0_12] : memref<256x128xf32, #tpu.memory_space<vmem>>, vector<256x128xf32>
      tpu.vector_store %arg7[%c0_11, %c0_12], %12 {strides = array<i32>} : memref<256x128xf32, #tpu.memory_space<vmem>>, vector<256x128xf32>,
    } else {
    }
    %c0 = arith.constant 0 : index
    %c0_1 = arith.constant 0 : index
    %3 = vector.load %arg7[%c0, %c0_1] : memref<256x128xf32, #tpu.memory_space<vmem>>, vector<256x128xf32>
    %c0_2 = arith.constant 0 : index
    %c0_3 = arith.constant 0 : index
    %4 = vector.load %arg3[%c0_2, %c0_3] : memref<256x36xbf16, #tpu.memory_space<vmem>>, vector<256x36xbf16>
    %c0_4 = arith.constant 0 : index
    %c0_5 = arith.constant 0 : index
    %5 = vector.load %arg4[%c0_4, %c0_5] : memref<36x128xbf16, #tpu.memory_space<vmem>>, vector<36x128xbf16>
    %cst = arith.constant dense<0.000000e+00> : vector<256x128xf32>
    %6 = tpu.matmul %4, %5, %cst {dimension_numbers = #tpu.dot_dimension_numbers<[1], [0], [0], [1], [0, 0, 1, 1], [], []>} : vector<256x36xbf16>, vector<36x128xbf16>, vector<256x128xf32> -> vector<256x128xf32>
    %7 = arith.addf %3, %6 : vector<256x128xf32>
    %c0_6 = arith.constant 0 : index
    %c0_7 = arith.constant 0 : index
    %8 = vector.load %arg7[%c0_6, %c0_7] : memref<256x128xf32, #tpu.memory_space<vmem>>, vector<256x128xf32>
    tpu.vector_store %arg7[%c0_6, %c0_7], %7 {strides = array<i32>} : memref<256x128xf32, #tpu.memory_space<vmem>>, vector<256x128xf32>,
    %c0_i32_8 = arith.constant 0 : i32
    %9 = arith.cmpi eq, %arg2, %c0_i32_8 : i32
    %10 = arith.extui %9 : i1 to i32
    %c0_i32_9 = arith.constant 0 : i32
    %11 = arith.cmpi ne, %10, %c0_i32_9 : i32
    scf.if %11 {
      %c0_10 = arith.constant 0 : index
      %c0_11 = arith.constant 0 : index
      %12 = vector.load %arg7[%c0_10, %c0_11] : memref<256x128xf32, #tpu.memory_space<vmem>>, vector<256x128xf32>
      %c0_12 = arith.constant 0 : index
      %c0_13 = arith.constant 0 : index
      %13 = vector.load %arg5[%c0_12, %c0_13] : memref<1x128xf32, #tpu.memory_space<vmem>>, vector<1x128xf32>
      %14 = vector.broadcast %13 : vector<1x128xf32> to vector<256x128xf32>
      %15 = arith.addf %12, %14 : vector<256x128xf32>
      %cst_14 = arith.constant 0.000000e+00 : f32
      %16 = vector.broadcast %cst_14 : f32 to vector<256x128xf32>
      %17 = arith.cmpf ogt, %15, %16 : vector<256x128xf32>
      %cst_15 = arith.constant 1.000000e-01 : f32
      %18 = vector.broadcast %cst_15 : f32 to vector<256x128xf32>
      %19 = arith.mulf %18, %15 : vector<256x128xf32>
      %20 = arith.select %17, %15, %19 : vector<256x128xi1>, vector<256x128xf32>
      %c0_16 = arith.constant 0 : index
      %c0_17 = arith.constant 0 : index
      %21 = vector.load %arg6[%c0_16, %c0_17] : memref<256x128xf32, #tpu.memory_space<vmem>>, vector<256x128xf32>
      tpu.vector_store %arg6[%c0_16, %c0_17], %20 {strides = array<i32>} : memref<256x128xf32, #tpu.memory_space<vmem>>, vector<256x128xf32>,
    } else {
    }
    return
  }
  func.func @transform_0(%arg0: i32, %arg1: i32, %arg2: i32) -> (i32, i32) {
    %c0_i32 = arith.constant 0 : i32
    return %arg0, %arg2 : i32, i32
  }
  func.func @transform_1(%arg0: i32, %arg1: i32, %arg2: i32) -> (i32, i32) {
    %c0_i32 = arith.constant 0 : i32
    return %arg2, %arg1 : i32, i32
  }
  func.func @transform_2(%arg0: i32, %arg1: i32, %arg2: i32) -> (i32, i32) {
    %c0_i32 = arith.constant 0 : i32
    %c0_i32_0 = arith.constant 0 : i32
    return %c0_i32, %arg1 : i32, i32
  }
  func.func @transform_3(%arg0: i32, %arg1: i32, %arg2: i32) -> (i32, i32) {
    %c0_i32 = arith.constant 0 : i32
    return %arg0, %arg1 : i32, i32
  }
}

</mosaic_0001>

<llo_original>
// kernel: convolutional_layer.1
$region0: #{convolutional_layer.1}
  #allocation0 [shape = 'u32[]', space=smem, size = 0x4, offset = 0x4, fixed_abs, tag = 'smem constant byte address 0x4 - core index']
  #allocation1 [shape = 'u32[144,128]{1,0:T(1,128)}', space=vmem, size = 0x12000, scoped, tag = 'internal scratch']
  #allocation2 [shape = 'f32[256,128]{1,0:T(8,128)}', space=vmem, size = 0x20000, scoped, tag = 'scratch operand']
  %s0 = inlined_call_operand.vmem [shape: bf16[512,36], index: 0, kind: input, shape index: {}]
  %s1 = inlined_call_operand.vmem [shape: bf16[36,128], index: 1, kind: input, shape index: {}]
  %s2 = inlined_call_operand.vmem [shape: f32[1,128], index: 2, kind: input, shape index: {}]
  %s3 = inlined_call_operand.vmem [shape: f32[512,128], index: 3, kind: output, shape index: {}]
  %s4 = sld [smem:[#allocation0]]
  $region53: #{convolutional_layer.1} parent=0
    _
  %s6 = ssub.s32 1, %s4
  %s7 = scalar_select 0, %s6, %s4
  loop: start=0, step=1, limit=4
  $region2: #{convolutional_layer.1} parent=0 // loop_pre_header
    _
  $region3: #{convolutional_layer.1} parent=0 // loop_header
    %s9 = sphi 0, %s13
    %p10 = scmp.ge.s32.totalorder %s9, 4
    %s16 = sphi 0, %s35
    %s17 = sphi 0, %s31
    %s18 = sphi 0, %s27
    %s19 = sphi 0, %s16
    %s20 = sphi 0, %s17
    %s21 = sphi 0, %s18
    %s22 = sphi 0, %s19
    %s23 = sphi 0, %s20
    %s24 = sphi 0, %s21
    %s40 = sphi 0, %s42
    %s43 = sphi 0, %s40
    %s44 = sphi 0, %s43
    %s60 = sphi 0, %s44
    %s68 = sphi 0, %s70
    %s71 = sphi 0, %s68
    %s72 = sphi 0, %s71
    %s88 = sphi 0, %s72
    %s94 = sphi 0, %s96
    %s97 = sphi 0, %s94
    %s98 = sphi 0, %s97
    %s114 = sphi 0, %s98
    %s122 = sphi 0, %s124
    %s125 = sphi 0, %s122
    %s126 = sphi 0, %s125
    %s142 = sphi 0, %s126
  $region4: #{convolutional_layer.1} parent=0 // loop_header_branch
    %12 = sbr.rel (%p10) target = $region8
  $region5: #{convolutional_layer.1} parent=0 // loop_body
    %s14 = ssub.s32 %s9, 1
    %s15 = ssub.s32 %s9, 2
    %s25 = sadd.s32 1, %s18
    %p26 = scmp.ge.s32.totalorder %s25, 1
    %s27 = scalar_select %p26, 0, %s25
    %s28 = sadd.s32 1, %s17
    %s29 = scalar_select %p26, %s28, %s17
    %p30 = scmp.ge.s32.totalorder %s29, 1
    %s31 = scalar_select %p30, 0, %s29
    %s32 = sadd.s32 1, %s16
    %s33 = scalar_select %p30, %s32, %s16
    %p34 = scmp.ge.s32.totalorder %s33, 2
    %s35 = scalar_select %p34, 0, %s33
    %s36 = ssub.s32 %s16, %s35
    %s37 = ssub.s32 %s18, %s27
    %s38 = sor.u32 %s36, %s37
    %p39 = scmp.eq.s32.totalorder %s38, 0
    %s41 = sadd.s32 %s40, 1
    %s42 = scalar_select %p39, %s40, %s41
    %p45 = pneg %p39
    %p46 = scmp.eq.s32.totalorder %s9, 1
    %p47 = por %p45, %p46
    %p48 = scmp.ne.s32.totalorder %s40, %s43
    %p49 = scmp.eq.s32.totalorder %s9, 0
    %p50 = por %p48, %p49
    %p51 = scmp.ne.s32.totalorder %s40, %s43
    %p52 = scmp.eq.s32.totalorder %s14, 1
    %p53 = por %p51, %p52
    %p54 = scmp.ne.s32.totalorder %s43, %s44
    %p55 = scmp.eq.s32.totalorder %s14, 0
    %p56 = por %p54, %p55
    %p57 = scmp.ne.s32.totalorder %s43, %s44
    %p58 = scmp.eq.s32.totalorder %s15, 1
    %p59 = por %p57, %p58
    %p61 = scmp.ne.s32.totalorder %s44, %s60
    %p62 = scmp.eq.s32.totalorder %s15, 0
    %p63 = por %p61, %p62
    %s64 = ssub.s32 %s18, %s27
    %s65 = ssub.s32 %s17, %s31
    %s66 = sor.u32 %s64, %s65
    %p67 = scmp.eq.s32.totalorder %s66, 0
    %s69 = sadd.s32 %s68, 1
    %s70 = scalar_select %p67, %s68, %s69
    %p73 = pneg %p67
    %p74 = scmp.eq.s32.totalorder %s9, 1
    %p75 = por %p73, %p74
    %p76 = scmp.ne.s32.totalorder %s68, %s71
    %p77 = scmp.eq.s32.totalorder %s9, 0
    %p78 = por %p76, %p77
    %p79 = scmp.ne.s32.totalorder %s68, %s71
    %p80 = scmp.eq.s32.totalorder %s14, 1
    %p81 = por %p79, %p80
    %p82 = scmp.ne.s32.totalorder %s71, %s72
    %p83 = scmp.eq.s32.totalorder %s14, 0
    %p84 = por %p82, %p83
    %p85 = scmp.ne.s32.totalorder %s71, %s72
    %p86 = scmp.eq.s32.totalorder %s15, 1
    %p87 = por %p85, %p86
    %p89 = scmp.ne.s32.totalorder %s72, %s88
    %p90 = scmp.eq.s32.totalorder %s15, 0
    %p91 = por %p89, %p90
    %s92 = ssub.s32 %s17, %s31
    %p93 = scmp.eq.s32.totalorder %s92, 0
    %s95 = sadd.s32 %s94, 1
    %s96 = scalar_select %p93, %s94, %s95
    %p99 = pneg %p93
    %p100 = scmp.eq.s32.totalorder %s9, 1
    %p101 = por %p99, %p100
    %p102 = scmp.ne.s32.totalorder %s94, %s97
    %p103 = scmp.eq.s32.totalorder %s9, 0
    %p104 = por %p102, %p103
    %p105 = scmp.ne.s32.totalorder %s94, %s97
    %p106 = scmp.eq.s32.totalorder %s14, 1
    %p107 = por %p105, %p106
    %p108 = scmp.ne.s32.totalorder %s97, %s98
    %p109 = scmp.eq.s32.totalorder %s14, 0
    %p110 = por %p108, %p109
    %p111 = scmp.ne.s32.totalorder %s97, %s98
    %p112 = scmp.eq.s32.totalorder %s15, 1
    %p113 = por %p111, %p112
    %p115 = scmp.ne.s32.totalorder %s98, %s114
    %p116 = scmp.eq.s32.totalorder %s15, 0
    %p117 = por %p115, %p116
    %s118 = ssub.s32 %s16, %s35
    %s119 = ssub.s32 %s17, %s31
    %s120 = sor.u32 %s118, %s119
    %p121 = scmp.eq.s32.totalorder %s120, 0
    %s123 = sadd.s32 %s122, 1
    %s124 = scalar_select %p121, %s122, %s123
    %p127 = pneg %p121
    %p128 = scmp.eq.s32.totalorder %s9, 1
    %p129 = por %p127, %p128
    %p130 = scmp.ne.s32.totalorder %s122, %s125
    %p131 = scmp.eq.s32.totalorder %s9, 0
    %p132 = por %p130, %p131
    %p133 = scmp.ne.s32.totalorder %s122, %s125
    %p134 = scmp.eq.s32.totalorder %s14, 1
    %p135 = por %p133, %p134
    %p136 = scmp.ne.s32.totalorder %s125, %s126
    %p137 = scmp.eq.s32.totalorder %s14, 0
    %p138 = por %p136, %p137
    %p139 = scmp.ne.s32.totalorder %s125, %s126
    %p140 = scmp.eq.s32.totalorder %s15, 1
    %p141 = por %p139, %p140
    %p143 = scmp.ne.s32.totalorder %s126, %s142
    %p144 = scmp.eq.s32.totalorder %s15, 0
    %p145 = por %p143, %p144
    %p146 = scmp.le.s32.totalorder 1, %s9
    %p147 = scmp.lt.s32.totalorder %s9, 3
    %p148 = pnand %p146, %p147
    %p149 = pneg %p148
    // Predicated region
    $region9: #{convolutional_layer.1} parent=5 // pred_check
      _
    $region10: #{convolutional_layer.1} parent=5 // pred_check_branch
      %151 = sbr.rel (%p148) target = $region12
    $region11: #{convolutional_layer.1} parent=5 // pred_region
      %s152 = ssub.s32 %s9, 1
      // Predicated region
      $region13: #{convolutional_layer.1} parent=11 // pred_check
        %p153 = pneg %p84
      $region14: #{convolutional_layer.1} parent=11 // pred_check_branch
        %155 = sbr.rel (%p153) target = $region16
      $region15: #{convolutional_layer.1} parent=11 // pred_region
        %s156 = smul.u32 5, %s21
        %p157 = scmp.lt.s32.totalorder %s156, 4
        %s158 = scalar_select %p157, %s156, 4
        %p159 = scmp.lt.s32.totalorder %s20, 0
        %s160 = scalar_select %p159, %s20, 0
        %s161 = sadd.s32 %s160, %s158
        %s162 = smul.addr %s161, 4
        %s163 = scalar_lea.vmem %s1, %s162
        %s164 = smul.u32 5, %s21
      $region16: #{convolutional_layer.1} parent=11 // pred_fallthru
        _
      // Predicated region
      $region17: #{convolutional_layer.1} parent=11 // pred_check
        %p165 = pneg %p110
      $region18: #{convolutional_layer.1} parent=11 // pred_check_branch
        %167 = sbr.rel (%p165) target = $region20
      $region19: #{convolutional_layer.1} parent=11 // pred_region
        %p168 = scmp.lt.s32.totalorder %s20, 0
        %s169 = scalar_select %p168, %s20, 0
        %s170 = scalar_lea.vmem %s2, %s169
      $region20: #{convolutional_layer.1} parent=11 // pred_fallthru
        _
    $region12: #{convolutional_layer.1} parent=5 // pred_fallthru
      _
    %p171 = scmp.lt.s32.totalorder %s9, 2
    // Predicated region
    $region21: #{convolutional_layer.1} parent=5 // pred_check
      %p172 = pneg %p171
    $region22: #{convolutional_layer.1} parent=5 // pred_check_branch
      %174 = sbr.rel (%p172) target = $region24
    $region23: #{convolutional_layer.1} parent=5 // pred_region
      // Predicated region
      $region25: #{convolutional_layer.1} parent=23 // pred_check
        %p175 = pneg %p50
      $region26: #{convolutional_layer.1} parent=23 // pred_check_branch
        %177 = sbr.rel (%p175) target = $region28
      $region27: #{convolutional_layer.1} parent=23 // pred_region
        %s178 = smul.u32 32, %s16
        %p179 = scmp.lt.s32.totalorder %s178, 63
        %s180 = scalar_select %p179, %s178, 63
        %p181 = scmp.lt.s32.totalorder %s18, 0
        %s182 = scalar_select %p181, %s18, 0
        %s183 = sadd.s32 %s182, %s180
        %s184 = smul.addr %s183, 4
        %s185 = scalar_lea.vmem %s0, %s184
        %s186 = smul.u32 32, %s16
      $region28: #{convolutional_layer.1} parent=23 // pred_fallthru
        _
    $region24: #{convolutional_layer.1} parent=5 // pred_fallthru
      _
    %p187 = scmp.le.s32.totalorder 1, %s9
    %p188 = scmp.lt.s32.totalorder %s9, 3
    %p189 = pnand %p187, %p188
    %p190 = pneg %p189
    // Predicated region
    $region29: #{convolutional_layer.1} parent=5 // pred_check
      _
    $region30: #{convolutional_layer.1} parent=5 // pred_check_branch
      %192 = sbr.rel (%p189) target = $region32
    $region31: #{convolutional_layer.1} parent=5 // pred_region
      %s193 = ssub.s32 %s9, 1
      %s194 = smul.u32 32, %s19
      %p195 = scmp.lt.s32.totalorder %s194, 63
      %s196 = scalar_select %p195, %s194, 63
      %p197 = scmp.lt.s32.totalorder %s21, 0
      %s198 = scalar_select %p197, %s21, 0
      %s199 = sadd.s32 %s198, %s196
      %s200 = smul.addr %s199, 4
      %s201 = scalar_lea.vmem %s0, %s200
      %p202 = pneg %p56
      %p203 = pneg %p53
      %s204 = smul.u32 5, %s21
      %p205 = scmp.lt.s32.totalorder %s204, 4
      %s206 = scalar_select %p205, %s204, 4
      %p207 = scmp.lt.s32.totalorder %s20, 0
      %s208 = scalar_select %p207, %s20, 0
      %s209 = sadd.s32 %s208, %s206
      %s210 = smul.addr %s209, 4
      %s211 = scalar_lea.vmem %s1, %s210
      %p212 = pneg %p84
      %p213 = pneg %p81
      %p214 = scmp.lt.s32.totalorder %s20, 0
      %s215 = scalar_select %p214, %s20, 0
      %s216 = scalar_lea.vmem %s2, %s215
      %p217 = pneg %p110
      %p218 = pneg %p107
      %p219 = pneg %p138
      %p220 = pneg %p135
      %s221 = smul.u32 32, %s19
      %p222 = scmp.lt.s32.totalorder %s221, 63
      %s223 = scalar_select %p222, %s221, 63
      %p224 = scmp.lt.s32.totalorder %s20, 0
      %s225 = scalar_select %p224, %s20, 0
      %s226 = sadd.s32 %s225, %s223
      %s227 = smul.addr %s226, 8
      %s228 = scalar_lea.vmem %s3, %s227
      %s229 = smul.u32 32, %s19
      %p230 = scmp.lt.s32.totalorder %s229, 63
      %s231 = scalar_select %p230, %s229, 63
      %p232 = scmp.lt.s32.totalorder %s21, 0
      %s233 = scalar_select %p232, %s21, 0
      %s234 = sadd.s32 %s233, %s231
      %s235 = smul.addr %s234, 4
      %s236 = scalar_lea.vmem %s0, %s235
      %s237 = smul.u32 32, %s19
      %s238 = smul.u32 5, %s21
      %p239 = scmp.lt.s32.totalorder %s238, 4
      %s240 = scalar_select %p239, %s238, 4
      %p241 = scmp.lt.s32.totalorder %s20, 0
      %s242 = scalar_select %p241, %s20, 0
      %s243 = sadd.s32 %s242, %s240
      %s244 = smul.addr %s243, 4
      %s245 = scalar_lea.vmem %s1, %s244
      %s246 = smul.u32 5, %s21
      %p247 = scmp.lt.s32.totalorder %s20, 0
      %s248 = scalar_select %p247, %s20, 0
      %s249 = scalar_lea.vmem %s2, %s248
      %s250 = smul.u32 32, %s19
      %p251 = scmp.lt.s32.totalorder %s250, 63
      %s252 = scalar_select %p251, %s250, 63
      %p253 = scmp.lt.s32.totalorder %s20, 0
      %s254 = scalar_select %p253, %s20, 0
      %s255 = sadd.s32 %s254, %s252
      %s256 = smul.addr %s255, 8
      %s257 = scalar_lea.vmem %s3, %s256
      %s258 = smul.u32 32, %s19
      %p260 = scmp.eq.s32.totalorder %s21, 0
      // Predicated region
      $region33: #{convolutional_layer.1} parent=31 // pred_check
        %p261 = pneg %p260
      $region34: #{convolutional_layer.1} parent=31 // pred_check_branch
        %263 = sbr.rel (%p261) target = $region36
      $region35: #{convolutional_layer.1} parent=31 // pred_region
        %264 = vst [vmem:[#allocation2] sm:$0xff] 0.0
        %265 = vst [vmem:[#allocation2 + $0x8] sm:$0xff] 0.0
        %266 = vst [vmem:[#allocation2 + $0x10] sm:$0xff] 0.0
        %267 = vst [vmem:[#allocation2 + $0x18] sm:$0xff] 0.0
        %268 = vst [vmem:[#allocation2 + $0x20] sm:$0xff] 0.0
        %269 = vst [vmem:[#allocation2 + $0x28] sm:$0xff] 0.0
        %270 = vst [vmem:[#allocation2 + $0x30] sm:$0xff] 0.0
        %271 = vst [vmem:[#allocation2 + $0x38] sm:$0xff] 0.0
        %272 = vst [vmem:[#allocation2 + $0x40] sm:$0xff] 0.0
        %273 = vst [vmem:[#allocation2 + $0x48] sm:$0xff] 0.0
        %274 = vst [vmem:[#allocation2 + $0x50] sm:$0xff] 0.0
        %275 = vst [vmem:[#allocation2 + $0x58] sm:$0xff] 0.0
        %276 = vst [vmem:[#allocation2 + $0x60] sm:$0xff] 0.0
        %277 = vst [vmem:[#allocation2 + $0x68] sm:$0xff] 0.0
        %278 = vst [vmem:[#allocation2 + $0x70] sm:$0xff] 0.0
        %279 = vst [vmem:[#allocation2 + $0x78] sm:$0xff] 0.0
        %280 = vst [vmem:[#allocation2 + $0x80] sm:$0xff] 0.0
        %281 = vst [vmem:[#allocation2 + $0x88] sm:$0xff] 0.0
        %282 = vst [vmem:[#allocation2 + $0x90] sm:$0xff] 0.0
        %283 = vst [vmem:[#allocation2 + $0x98] sm:$0xff] 0.0
        %284 = vst [vmem:[#allocation2 + $0xa0] sm:$0xff] 0.0
        %285 = vst [vmem:[#allocation2 + $0xa8] sm:$0xff] 0.0
        %286 = vst [vmem:[#allocation2 + $0xb0] sm:$0xff] 0.0
        %287 = vst [vmem:[#allocation2 + $0xb8] sm:$0xff] 0.0
        %288 = vst [vmem:[#allocation2 + $0xc0] sm:$0xff] 0.0
        %289 = vst [vmem:[#allocation2 + $0xc8] sm:$0xff] 0.0
        %290 = vst [vmem:[#allocation2 + $0xd0] sm:$0xff] 0.0
        %291 = vst [vmem:[#allocation2 + $0xd8] sm:$0xff] 0.0
        %292 = vst [vmem:[#allocation2 + $0xe0] sm:$0xff] 0.0
        %293 = vst [vmem:[#allocation2 + $0xe8] sm:$0xff] 0.0
        %294 = vst [vmem:[#allocation2 + $0xf0] sm:$0xff] 0.0
        %295 = vst [vmem:[#allocation2 + $0xf8] sm:$0xff] 0.0
      $region36: #{convolutional_layer.1} parent=31 // pred_fallthru
        _
      %v296 = vld [vmem:[#allocation2] sm:$0xff]
      %v297 = vld [vmem:[#allocation2 + $0x8] sm:$0xff]
      %v298 = vld [vmem:[#allocation2 + $0x10] sm:$0xff]
      %v299 = vld [vmem:[#allocation2 + $0x18] sm:$0xff]
      %v300 = vld [vmem:[#allocation2 + $0x20] sm:$0xff]
      %v301 = vld [vmem:[#allocation2 + $0x28] sm:$0xff]
      %v302 = vld [vmem:[#allocation2 + $0x30] sm:$0xff]
      %v303 = vld [vmem:[#allocation2 + $0x38] sm:$0xff]
      %v304 = vld [vmem:[#allocation2 + $0x40] sm:$0xff]
      %v305 = vld [vmem:[#allocation2 + $0x48] sm:$0xff]
      %v306 = vld [vmem:[#allocation2 + $0x50] sm:$0xff]
      %v307 = vld [vmem:[#allocation2 + $0x58] sm:$0xff]
      %v308 = vld [vmem:[#allocation2 + $0x60] sm:$0xff]
      %v309 = vld [vmem:[#allocation2 + $0x68] sm:$0xff]
      %v310 = vld [vmem:[#allocation2 + $0x70] sm:$0xff]
      %v311 = vld [vmem:[#allocation2 + $0x78] sm:$0xff]
      %v312 = vld [vmem:[#allocation2 + $0x80] sm:$0xff]
      %v313 = vld [vmem:[#allocation2 + $0x88] sm:$0xff]
      %v314 = vld [vmem:[#allocation2 + $0x90] sm:$0xff]
      %v315 = vld [vmem:[#allocation2 + $0x98] sm:$0xff]
      %v316 = vld [vmem:[#allocation2 + $0xa0] sm:$0xff]
      %v317 = vld [vmem:[#allocation2 + $0xa8] sm:$0xff]
      %v318 = vld [vmem:[#allocation2 + $0xb0] sm:$0xff]
      %v319 = vld [vmem:[#allocation2 + $0xb8] sm:$0xff]
      %v320 = vld [vmem:[#allocation2 + $0xc0] sm:$0xff]
      %v321 = vld [vmem:[#allocation2 + $0xc8] sm:$0xff]
      %v322 = vld [vmem:[#allocation2 + $0xd0] sm:$0xff]
      %v323 = vld [vmem:[#allocation2 + $0xd8] sm:$0xff]
      %v324 = vld [vmem:[#allocation2 + $0xe0] sm:$0xff]
      %v325 = vld [vmem:[#allocation2 + $0xe8] sm:$0xff]
      %v326 = vld [vmem:[#allocation2 + $0xf0] sm:$0xff]
      %v327 = vld [vmem:[#allocation2 + $0xf8] sm:$0xff]
      %v328 = vld [vmem:[%s236] sm:$0xf]
      %v329 = vld [vmem:[%s236 + $0x4] sm:$0xf]
      %v330 = vld [vmem:[%s236 + $0x8] sm:$0xf]
      %v331 = vld [vmem:[%s236 + $0xc] sm:$0xf]
      %v332 = vld [vmem:[%s236 + $0x10] sm:$0xf]
      %v333 = vld [vmem:[%s236 + $0x14] sm:$0xf]
      %v334 = vld [vmem:[%s236 + $0x18] sm:$0xf]
      %v335 = vld [vmem:[%s236 + $0x1c] sm:$0xf]
      %v336 = vld [vmem:[%s236 + $0x20] sm:$0xf]
      %v337 = vld [vmem:[%s236 + $0x24] sm:$0xf]
      %v338 = vld [vmem:[%s236 + $0x28] sm:$0xf]
      %v339 = vld [vmem:[%s236 + $0x2c] sm:$0xf]
      %v340 = vld [vmem:[%s236 + $0x30] sm:$0xf]
      %v341 = vld [vmem:[%s236 + $0x34] sm:$0xf]
      %v342 = vld [vmem:[%s236 + $0x38] sm:$0xf]
      %v343 = vld [vmem:[%s236 + $0x3c] sm:$0xf]
      %v344 = vld [vmem:[%s236 + $0x40] sm:$0xf]
      %v345 = vld [vmem:[%s236 + $0x44] sm:$0xf]
      %v346 = vld [vmem:[%s236 + $0x48] sm:$0xf]
      %v347 = vld [vmem:[%s236 + $0x4c] sm:$0xf]
      %v348 = vld [vmem:[%s236 + $0x50] sm:$0xf]
      %v349 = vld [vmem:[%s236 + $0x54] sm:$0xf]
      %v350 = vld [vmem:[%s236 + $0x58] sm:$0xf]
      %v351 = vld [vmem:[%s236 + $0x5c] sm:$0xf]
      %v352 = vld [vmem:[%s236 + $0x60] sm:$0xf]
      %v353 = vld [vmem:[%s236 + $0x64] sm:$0xf]
      %v354 = vld [vmem:[%s236 + $0x68] sm:$0xf]
      %v355 = vld [vmem:[%s236 + $0x6c] sm:$0xf]
      %v356 = vld [vmem:[%s236 + $0x70] sm:$0xf]
      %v357 = vld [vmem:[%s236 + $0x74] sm:$0xf]
      %v358 = vld [vmem:[%s236 + $0x78] sm:$0xf]
      %v359 = vld [vmem:[%s236 + $0x7c] sm:$0xf]
      %v360 = vld [vmem:[%s245] sm:$0xf]
      %v361 = vld [vmem:[%s245 + $0x4] sm:$0xf]
      %v362 = vld [vmem:[%s245 + $0x8] sm:$0xf]
      %v363 = vld [vmem:[%s245 + $0xc] sm:$0xf]
      %v364 = vld [vmem:[%s245 + $0x10] sm:$0x3]
      %v397 = vunpack.c.l.b16 %v328
      %v398 = vunpack.c.l.b16 %v329
      %v399 = vunpack.c.l.b16 %v330
      %v400 = vunpack.c.l.b16 %v331
      %v401 = vunpack.c.l.b16 %v332
      %v402 = vunpack.c.l.b16 %v333
      %v403 = vunpack.c.l.b16 %v334
      %v404 = vunpack.c.l.b16 %v335
      %v405 = vunpack.c.l.b16 %v336
      %v406 = vunpack.c.l.b16 %v337
      %v407 = vunpack.c.l.b16 %v338
      %v408 = vunpack.c.l.b16 %v339
      %v409 = vunpack.c.l.b16 %v340
      %v410 = vunpack.c.l.b16 %v341
      %v411 = vunpack.c.l.b16 %v342
      %v412 = vunpack.c.l.b16 %v343
      %v413 = vunpack.c.l.b16 %v344
      %v414 = vunpack.c.l.b16 %v345
      %v415 = vunpack.c.l.b16 %v346
      %v416 = vunpack.c.l.b16 %v347
      %v417 = vunpack.c.l.b16 %v348
      %v418 = vunpack.c.l.b16 %v349
      %v419 = vunpack.c.l.b16 %v350
      %v420 = vunpack.c.l.b16 %v351
      %v421 = vunpack.c.l.b16 %v352
      %v422 = vunpack.c.l.b16 %v353
      %v423 = vunpack.c.l.b16 %v354
      %v424 = vunpack.c.l.b16 %v355
      %v425 = vunpack.c.l.b16 %v356
      %v426 = vunpack.c.l.b16 %v357
      %v427 = vunpack.c.l.b16 %v358
      %v428 = vunpack.c.l.b16 %v359
      %v429 = vpack.c.b16 %v398, %v397
      %v430 = vpack.c.b16 %v400, %v399
      %v431 = vpack.c.b16 %v402, %v401
      %v432 = vpack.c.b16 %v404, %v403
      %v433 = vpack.c.b16 %v406, %v405
      %v434 = vpack.c.b16 %v408, %v407
      %v435 = vpack.c.b16 %v410, %v409
      %v436 = vpack.c.b16 %v412, %v411
      %v437 = vpack.c.b16 %v414, %v413
      %v438 = vpack.c.b16 %v416, %v415
      %v439 = vpack.c.b16 %v418, %v417
      %v440 = vpack.c.b16 %v420, %v419
      %v441 = vpack.c.b16 %v422, %v421
      %v442 = vpack.c.b16 %v424, %v423
      %v443 = vpack.c.b16 %v426, %v425
      %v444 = vpack.c.b16 %v428, %v427
      %v450 = vunpack.c.l.b16 %v360
      %v451 = vunpack.c.l.b16 %v361
      %v452 = vunpack.c.l.b16 %v362
      %v453 = vunpack.c.l.b16 %v363
      %v454 = vunpack.c.l.b16 %v364
      %v455 = vpack.c.b16 %v451, %v450
      %v456 = vpack.c.b16 %v453, %v452
      %v457 = vpack.c.b16 %v454, %v454
      %vm460 = vcmask 293888
      %v462 = vsel %vm460, %v429, 0
      %v465 = vsel %vm460, %v430, 0
      %v468 = vsel %vm460, %v431, 0
      %v471 = vsel %vm460, %v432, 0
      %v474 = vsel %vm460, %v433, 0
      %v477 = vsel %vm460, %v434, 0
      %v480 = vsel %vm460, %v435, 0
      %v483 = vsel %vm460, %v436, 0
      %v486 = vsel %vm460, %v437, 0
      %v489 = vsel %vm460, %v438, 0
      %v492 = vsel %vm460, %v439, 0
      %v495 = vsel %vm460, %v440, 0
      %v498 = vsel %vm460, %v441, 0
      %v501 = vsel %vm460, %v442, 0
      %v504 = vsel %vm460, %v443, 0
      %v507 = vsel %vm460, %v444, 0
      %vm509 = vcmask 1041408
      %v511 = vsel %vm509, %v457, 0
      %513 = vmatprep.subr.bf16.mxu0 0
      %514 = vmatpush1.bf16.msra.mxu0 0
      %515 = vmatprep.subr.bf16.mxu0 0
      %516 = vmatpush1.bf16.msra.mxu0 0
      %517 = vmatprep.subr.bf16.mxu0 0
      %518 = vmatpush1.bf16.msra.mxu0 0
      %519 = vmatprep.subr.bf16.mxu0 0
      %520 = vmatpush1.bf16.msra.mxu0 0
      %521 = vmatprep.subr.bf16.mxu0 0
      %522 = vmatpush1.bf16.msra.mxu0 0
      %523 = vmatprep.subr.bf16.mxu0 0
      %524 = vmatpush1.bf16.msra.mxu0 %v511
      %525 = vmatprep.subr.bf16.mxu0 0
      %526 = vmatpush1.bf16.msra.mxu0 %v456
      %527 = vmatprep.subr.bf16.mxu0 0
      %528 = vmatpush1.bf16.msra.mxu0 %v455
      %529 = vmatprep.subr.bf16.mxu0 0
      %530 = vmatpush2.bf16.msra.mxu0 0
      %531 = vmatprep.subr.bf16.mxu0 0
      %532 = vmatpush2.bf16.msra.mxu0 0
      %533 = vmatprep.subr.bf16.mxu0 0
      %534 = vmatpush2.bf16.msra.mxu0 0
      %535 = vmatprep.subr.bf16.mxu0 0
      %536 = vmatpush2.bf16.msra.mxu0 0
      %537 = vmatprep.subr.bf16.mxu0 0
      %538 = vmatpush2.bf16.msra.mxu0 0
      %539 = vmatprep.subr.bf16.mxu0 0
      %540 = vmatpush2.bf16.msra.mxu0 0
      %541 = vmatprep.subr.bf16.mxu0 0
      %542 = vmatpush2.bf16.msra.mxu0 0
      %543 = vmatprep.subr.bf16.mxu0 0
      %544 = vmatpush2.bf16.msra.mxu0 0
      %545 = vmatprep.mubr.bf16.mxu0 0
      %546 = vmatmul.mubr.bf16.gmra.mxu0 %v462
      %v547 = vpop.f32.mrf.mxu0
      %v548 = vadd.f32 0.0, %v547
      %v549 = vpop.f32.mrf.mxu0
      %v550 = vpop.f32.mrf.mxu0
      %v551 = vadd.f32 0.0, %v550
      %v552 = vpop.f32.mrf.mxu0
      %553 = vmatprep.mubr.bf16.mxu0 0
      %554 = vmatmul.mubr.bf16.gmra.mxu0 %v465
      %v555 = vpop.f32.mrf.mxu0
      %v556 = vadd.f32 0.0, %v555
      %v557 = vpop.f32.mrf.mxu0
      %v558 = vpop.f32.mrf.mxu0
      %v559 = vadd.f32 0.0, %v558
      %v560 = vpop.f32.mrf.mxu0
      %561 = vmatprep.mubr.bf16.mxu0 0
      %562 = vmatmul.mubr.bf16.gmra.mxu0 %v468
      %v563 = vpop.f32.mrf.mxu0
      %v564 = vadd.f32 0.0, %v563
      %v565 = vpop.f32.mrf.mxu0
      %v566 = vpop.f32.mrf.mxu0
      %v567 = vadd.f32 0.0, %v566
      %v568 = vpop.f32.mrf.mxu0
      %569 = vmatprep.mubr.bf16.mxu0 0
      %570 = vmatmul.mubr.bf16.gmra.mxu0 %v471
      %v571 = vpop.f32.mrf.mxu0
      %v572 = vadd.f32 0.0, %v571
      %v573 = vpop.f32.mrf.mxu0
      %v574 = vpop.f32.mrf.mxu0
      %v575 = vadd.f32 0.0, %v574
      %v576 = vpop.f32.mrf.mxu0
      %577 = vmatprep.mubr.bf16.mxu0 0
      %578 = vmatmul.mubr.bf16.gmra.mxu0 %v474
      %v579 = vpop.f32.mrf.mxu0
      %v580 = vadd.f32 0.0, %v579
      %v581 = vpop.f32.mrf.mxu0
      %v582 = vpop.f32.mrf.mxu0
      %v583 = vadd.f32 0.0, %v582
      %v584 = vpop.f32.mrf.mxu0
      %585 = vmatprep.mubr.bf16.mxu0 0
      %586 = vmatmul.mubr.bf16.gmra.mxu0 %v477
      %v587 = vpop.f32.mrf.mxu0
      %v588 = vadd.f32 0.0, %v587
      %v589 = vpop.f32.mrf.mxu0
      %v590 = vpop.f32.mrf.mxu0
      %v591 = vadd.f32 0.0, %v590
      %v592 = vpop.f32.mrf.mxu0
      %593 = vmatprep.mubr.bf16.mxu0 0
      %594 = vmatmul.mubr.bf16.gmra.mxu0 %v480
      %v595 = vpop.f32.mrf.mxu0
      %v596 = vadd.f32 0.0, %v595
      %v597 = vpop.f32.mrf.mxu0
      %v598 = vpop.f32.mrf.mxu0
      %v599 = vadd.f32 0.0, %v598
      %v600 = vpop.f32.mrf.mxu0
      %601 = vmatprep.mubr.bf16.mxu0 0
      %602 = vmatmul.mubr.bf16.gmra.mxu0 %v483
      %v603 = vpop.f32.mrf.mxu0
      %v604 = vadd.f32 0.0, %v603
      %v605 = vpop.f32.mrf.mxu0
      %v606 = vpop.f32.mrf.mxu0
      %v607 = vadd.f32 0.0, %v606
      %v608 = vpop.f32.mrf.mxu0
      %609 = vmatprep.mubr.bf16.mxu0 0
      %610 = vmatmul.mubr.bf16.gmra.mxu0 %v486
      %v611 = vpop.f32.mrf.mxu0
      %v612 = vadd.f32 0.0, %v611
      %v613 = vpop.f32.mrf.mxu0
      %v614 = vpop.f32.mrf.mxu0
      %v615 = vadd.f32 0.0, %v614
      %v616 = vpop.f32.mrf.mxu0
      %617 = vmatprep.mubr.bf16.mxu0 0
      %618 = vmatmul.mubr.bf16.gmra.mxu0 %v489
      %v619 = vpop.f32.mrf.mxu0
      %v620 = vadd.f32 0.0, %v619
      %v621 = vpop.f32.mrf.mxu0
      %v622 = vpop.f32.mrf.mxu0
      %v623 = vadd.f32 0.0, %v622
      %v624 = vpop.f32.mrf.mxu0
      %625 = vmatprep.mubr.bf16.mxu0 0
      %626 = vmatmul.mubr.bf16.gmra.mxu0 %v492
      %v627 = vpop.f32.mrf.mxu0
      %v628 = vadd.f32 0.0, %v627
      %v629 = vpop.f32.mrf.mxu0
      %v630 = vpop.f32.mrf.mxu0
      %v631 = vadd.f32 0.0, %v630
      %v632 = vpop.f32.mrf.mxu0
      %633 = vmatprep.mubr.bf16.mxu0 0
      %634 = vmatmul.mubr.bf16.gmra.mxu0 %v495
      %v635 = vpop.f32.mrf.mxu0
      %v636 = vadd.f32 0.0, %v635
      %v637 = vpop.f32.mrf.mxu0
      %v638 = vpop.f32.mrf.mxu0
      %v639 = vadd.f32 0.0, %v638
      %v640 = vpop.f32.mrf.mxu0
      %641 = vmatprep.mubr.bf16.mxu0 0
      %642 = vmatmul.mubr.bf16.gmra.mxu0 %v498
      %v643 = vpop.f32.mrf.mxu0
      %v644 = vadd.f32 0.0, %v643
      %v645 = vpop.f32.mrf.mxu0
      %v646 = vpop.f32.mrf.mxu0
      %v647 = vadd.f32 0.0, %v646
      %v648 = vpop.f32.mrf.mxu0
      %649 = vmatprep.mubr.bf16.mxu0 0
      %650 = vmatmul.mubr.bf16.gmra.mxu0 %v501
      %v651 = vpop.f32.mrf.mxu0
      %v652 = vadd.f32 0.0, %v651
      %v653 = vpop.f32.mrf.mxu0
      %v654 = vpop.f32.mrf.mxu0
      %v655 = vadd.f32 0.0, %v654
      %v656 = vpop.f32.mrf.mxu0
      %657 = vmatprep.mubr.bf16.mxu0 0
      %658 = vmatmul.mubr.bf16.gmra.mxu0 %v504
      %v659 = vpop.f32.mrf.mxu0
      %v660 = vadd.f32 0.0, %v659
      %v661 = vpop.f32.mrf.mxu0
      %v662 = vpop.f32.mrf.mxu0
      %v663 = vadd.f32 0.0, %v662
      %v664 = vpop.f32.mrf.mxu0
      %665 = vmatprep.mubr.bf16.mxu0 0
      %666 = vmatmul.mubr.bf16.gmra.mxu0 %v507
      %v667 = vpop.f32.mrf.mxu0
      %v668 = vadd.f32 0.0, %v667
      %v669 = vpop.f32.mrf.mxu0
      %v670 = vpop.f32.mrf.mxu0
      %v671 = vadd.f32 0.0, %v670
      %v672 = vpop.f32.mrf.mxu0
      %673 = vdwg.mxu0
      %v674 = vadd.f32 %v296, %v548
      %v675 = vadd.f32 %v297, %v551
      %v676 = vadd.f32 %v298, %v556
      %v677 = vadd.f32 %v299, %v559
      %v678 = vadd.f32 %v300, %v564
      %v679 = vadd.f32 %v301, %v567
      %v680 = vadd.f32 %v302, %v572
      %v681 = vadd.f32 %v303, %v575
      %v682 = vadd.f32 %v304, %v580
      %v683 = vadd.f32 %v305, %v583
      %v684 = vadd.f32 %v306, %v588
      %v685 = vadd.f32 %v307, %v591
      %v686 = vadd.f32 %v308, %v596
      %v687 = vadd.f32 %v309, %v599
      %v688 = vadd.f32 %v310, %v604
      %v689 = vadd.f32 %v311, %v607
      %v690 = vadd.f32 %v312, %v612
      %v691 = vadd.f32 %v313, %v615
      %v692 = vadd.f32 %v314, %v620
      %v693 = vadd.f32 %v315, %v623
      %v694 = vadd.f32 %v316, %v628
      %v695 = vadd.f32 %v317, %v631
      %v696 = vadd.f32 %v318, %v636
      %v697 = vadd.f32 %v319, %v639
      %v698 = vadd.f32 %v320, %v644
      %v699 = vadd.f32 %v321, %v647
      %v700 = vadd.f32 %v322, %v652
      %v701 = vadd.f32 %v323, %v655
      %v702 = vadd.f32 %v324, %v660
      %v703 = vadd.f32 %v325, %v663
      %v704 = vadd.f32 %v326, %v668
      %v705 = vadd.f32 %v327, %v671
      %706 = vst [vmem:[#allocation2] sm:$0xff] %v674
      %707 = vst [vmem:[#allocation2 + $0x8] sm:$0xff] %v675
      %708 = vst [vmem:[#allocation2 + $0x10] sm:$0xff] %v676
      %709 = vst [vmem:[#allocation2 + $0x18] sm:$0xff] %v677
      %710 = vst [vmem:[#allocation2 + $0x20] sm:$0xff] %v678
      %711 = vst [vmem:[#allocation2 + $0x28] sm:$0xff] %v679
      %712 = vst [vmem:[#allocation2 + $0x30] sm:$0xff] %v680
      %713 = vst [vmem:[#allocation2 + $0x38] sm:$0xff] %v681
      %714 = vst [vmem:[#allocation2 + $0x40] sm:$0xff] %v682
      %715 = vst [vmem:[#allocation2 + $0x48] sm:$0xff] %v683
      %716 = vst [vmem:[#allocation2 + $0x50] sm:$0xff] %v684
      %717 = vst [vmem:[#allocation2 + $0x58] sm:$0xff] %v685
      %718 = vst [vmem:[#allocation2 + $0x60] sm:$0xff] %v686
      %719 = vst [vmem:[#allocation2 + $0x68] sm:$0xff] %v687
      %720 = vst [vmem:[#allocation2 + $0x70] sm:$0xff] %v688
      %721 = vst [vmem:[#allocation2 + $0x78] sm:$0xff] %v689
      %722 = vst [vmem:[#allocation2 + $0x80] sm:$0xff] %v690
      %723 = vst [vmem:[#allocation2 + $0x88] sm:$0xff] %v691
      %724 = vst [vmem:[#allocation2 + $0x90] sm:$0xff] %v692
      %725 = vst [vmem:[#allocation2 + $0x98] sm:$0xff] %v693
      %726 = vst [vmem:[#allocation2 + $0xa0] sm:$0xff] %v694
      %727 = vst [vmem:[#allocation2 + $0xa8] sm:$0xff] %v695
      %728 = vst [vmem:[#allocation2 + $0xb0] sm:$0xff] %v696
      %729 = vst [vmem:[#allocation2 + $0xb8] sm:$0xff] %v697
      %730 = vst [vmem:[#allocation2 + $0xc0] sm:$0xff] %v698
      %731 = vst [vmem:[#allocation2 + $0xc8] sm:$0xff] %v699
      %732 = vst [vmem:[#allocation2 + $0xd0] sm:$0xff] %v700
      %733 = vst [vmem:[#allocation2 + $0xd8] sm:$0xff] %v701
      %734 = vst [vmem:[#allocation2 + $0xe0] sm:$0xff] %v702
      %735 = vst [vmem:[#allocation2 + $0xe8] sm:$0xff] %v703
      %736 = vst [vmem:[#allocation2 + $0xf0] sm:$0xff] %v704
      %737 = vst [vmem:[#allocation2 + $0xf8] sm:$0xff] %v705
      // Predicated region
      $region37: #{convolutional_layer.1} parent=31 // pred_check
        %p738 = pneg %p260
      $region38: #{convolutional_layer.1} parent=31 // pred_check_branch
        %740 = sbr.rel (%p738) target = $region40
      $region39: #{convolutional_layer.1} parent=31 // pred_region
        %v741 = vld [vmem:[#allocation2] sm:$0xff]
        %v742 = vld [vmem:[#allocation2 + $0x8] sm:$0xff]
        %v743 = vld [vmem:[#allocation2 + $0x10] sm:$0xff]
        %v744 = vld [vmem:[#allocation2 + $0x18] sm:$0xff]
        %v745 = vld [vmem:[#allocation2 + $0x20] sm:$0xff]
        %v746 = vld [vmem:[#allocation2 + $0x28] sm:$0xff]
        %v747 = vld [vmem:[#allocation2 + $0x30] sm:$0xff]
        %v748 = vld [vmem:[#allocation2 + $0x38] sm:$0xff]
        %v749 = vld [vmem:[#allocation2 + $0x40] sm:$0xff]
        %v750 = vld [vmem:[#allocation2 + $0x48] sm:$0xff]
        %v751 = vld [vmem:[#allocation2 + $0x50] sm:$0xff]
        %v752 = vld [vmem:[#allocation2 + $0x58] sm:$0xff]
        %v753 = vld [vmem:[#allocation2 + $0x60] sm:$0xff]
        %v754 = vld [vmem:[#allocation2 + $0x68] sm:$0xff]
        %v755 = vld [vmem:[#allocation2 + $0x70] sm:$0xff]
        %v756 = vld [vmem:[#allocation2 + $0x78] sm:$0xff]
        %v757 = vld [vmem:[#allocation2 + $0x80] sm:$0xff]
        %v758 = vld [vmem:[#allocation2 + $0x88] sm:$0xff]
        %v759 = vld [vmem:[#allocation2 + $0x90] sm:$0xff]
        %v760 = vld [vmem:[#allocation2 + $0x98] sm:$0xff]
        %v761 = vld [vmem:[#allocation2 + $0xa0] sm:$0xff]
        %v762 = vld [vmem:[#allocation2 + $0xa8] sm:$0xff]
        %v763 = vld [vmem:[#allocation2 + $0xb0] sm:$0xff]
        %v764 = vld [vmem:[#allocation2 + $0xb8] sm:$0xff]
        %v765 = vld [vmem:[#allocation2 + $0xc0] sm:$0xff]
        %v766 = vld [vmem:[#allocation2 + $0xc8] sm:$0xff]
        %v767 = vld [vmem:[#allocation2 + $0xd0] sm:$0xff]
        %v768 = vld [vmem:[#allocation2 + $0xd8] sm:$0xff]
        %v769 = vld [vmem:[#allocation2 + $0xe0] sm:$0xff]
        %v770 = vld [vmem:[#allocation2 + $0xe8] sm:$0xff]
        %v771 = vld [vmem:[#allocation2 + $0xf0] sm:$0xff]
        %v772 = vld [vmem:[#allocation2 + $0xf8] sm:$0xff]
        %v773 = vld [vmem:[%s249] sm:$0x1]
        %v775 = vlaneseq
        %v776 = vshrl.u32 %v775, 7
        %v777 = vsub.s32 0, %v776
        %v778 = vrot.slane %v773, %v777
        %v780 = vadd.f32 %v741, %v778
        %v781 = vadd.f32 %v742, %v778
        %v782 = vadd.f32 %v743, %v778
        %v783 = vadd.f32 %v744, %v778
        %v784 = vadd.f32 %v745, %v778
        %v785 = vadd.f32 %v746, %v778
        %v786 = vadd.f32 %v747, %v778
        %v787 = vadd.f32 %v748, %v778
        %v788 = vadd.f32 %v749, %v778
        %v789 = vadd.f32 %v750, %v778
        %v790 = vadd.f32 %v751, %v778
        %v791 = vadd.f32 %v752, %v778
        %v792 = vadd.f32 %v753, %v778
        %v793 = vadd.f32 %v754, %v778
        %v794 = vadd.f32 %v755, %v778
        %v795 = vadd.f32 %v756, %v778
        %v796 = vadd.f32 %v757, %v778
        %v797 = vadd.f32 %v758, %v778
        %v798 = vadd.f32 %v759, %v778
        %v799 = vadd.f32 %v760, %v778
        %v800 = vadd.f32 %v761, %v778
        %v801 = vadd.f32 %v762, %v778
        %v802 = vadd.f32 %v763, %v778
        %v803 = vadd.f32 %v764, %v778
        %v804 = vadd.f32 %v765, %v778
        %v805 = vadd.f32 %v766, %v778
        %v806 = vadd.f32 %v767, %v778
        %v807 = vadd.f32 %v768, %v778
        %v808 = vadd.f32 %v769, %v778
        %v809 = vadd.f32 %v770, %v778
        %v810 = vadd.f32 %v771, %v778
        %v811 = vadd.f32 %v772, %v778
        %vm812 = vcmp.gt.f32.partialorder %v780, 0.0
        %vm813 = vcmp.gt.f32.partialorder %v781, 0.0
        %vm814 = vcmp.gt.f32.partialorder %v782, 0.0
        %vm815 = vcmp.gt.f32.partialorder %v783, 0.0
        %vm816 = vcmp.gt.f32.partialorder %v784, 0.0
        %vm817 = vcmp.gt.f32.partialorder %v785, 0.0
        %vm818 = vcmp.gt.f32.partialorder %v786, 0.0
        %vm819 = vcmp.gt.f32.partialorder %v787, 0.0
        %vm820 = vcmp.gt.f32.partialorder %v788, 0.0
        %vm821 = vcmp.gt.f32.partialorder %v789, 0.0
        %vm822 = vcmp.gt.f32.partialorder %v790, 0.0
        %vm823 = vcmp.gt.f32.partialorder %v791, 0.0
        %vm824 = vcmp.gt.f32.partialorder %v792, 0.0
        %vm825 = vcmp.gt.f32.partialorder %v793, 0.0
        %vm826 = vcmp.gt.f32.partialorder %v794, 0.0
        %vm827 = vcmp.gt.f32.partialorder %v795, 0.0
        %vm828 = vcmp.gt.f32.partialorder %v796, 0.0
        %vm829 = vcmp.gt.f32.partialorder %v797, 0.0
        %vm830 = vcmp.gt.f32.partialorder %v798, 0.0
        %vm831 = vcmp.gt.f32.partialorder %v799, 0.0
        %vm832 = vcmp.gt.f32.partialorder %v800, 0.0
        %vm833 = vcmp.gt.f32.partialorder %v801, 0.0
        %vm834 = vcmp.gt.f32.partialorder %v802, 0.0
        %vm835 = vcmp.gt.f32.partialorder %v803, 0.0
        %vm836 = vcmp.gt.f32.partialorder %v804, 0.0
        %vm837 = vcmp.gt.f32.partialorder %v805, 0.0
        %vm838 = vcmp.gt.f32.partialorder %v806, 0.0
        %vm839 = vcmp.gt.f32.partialorder %v807, 0.0
        %vm840 = vcmp.gt.f32.partialorder %v808, 0.0
        %vm841 = vcmp.gt.f32.partialorder %v809, 0.0
        %vm842 = vcmp.gt.f32.partialorder %v810, 0.0
        %vm843 = vcmp.gt.f32.partialorder %v811, 0.0
        %v844 = vmul.f32 %v780, 0.1
        %v845 = vmul.f32 %v781, 0.1
        %v846 = vmul.f32 %v782, 0.1
        %v847 = vmul.f32 %v783, 0.1
        %v848 = vmul.f32 %v784, 0.1
        %v849 = vmul.f32 %v785, 0.1
        %v850 = vmul.f32 %v786, 0.1
        %v851 = vmul.f32 %v787, 0.1
        %v852 = vmul.f32 %v788, 0.1
        %v853 = vmul.f32 %v789, 0.1
        %v854 = vmul.f32 %v790, 0.1
        %v855 = vmul.f32 %v791, 0.1
        %v856 = vmul.f32 %v792, 0.1
        %v857 = vmul.f32 %v793, 0.1
        %v858 = vmul.f32 %v794, 0.1
        %v859 = vmul.f32 %v795, 0.1
        %v860 = vmul.f32 %v796, 0.1
        %v861 = vmul.f32 %v797, 0.1
        %v862 = vmul.f32 %v798, 0.1
        %v863 = vmul.f32 %v799, 0.1
        %v864 = vmul.f32 %v800, 0.1
        %v865 = vmul.f32 %v801, 0.1
        %v866 = vmul.f32 %v802, 0.1
        %v867 = vmul.f32 %v803, 0.1
        %v868 = vmul.f32 %v804, 0.1
        %v869 = vmul.f32 %v805, 0.1
        %v870 = vmul.f32 %v806, 0.1
        %v871 = vmul.f32 %v807, 0.1
        %v872 = vmul.f32 %v808, 0.1
        %v873 = vmul.f32 %v809, 0.1
        %v874 = vmul.f32 %v810, 0.1
        %v875 = vmul.f32 %v811, 0.1
        %v876 = vsel %vm812, %v780, %v844
        %v877 = vsel %vm813, %v781, %v845
        %v878 = vsel %vm814, %v782, %v846
        %v879 = vsel %vm815, %v783, %v847
        %v880 = vsel %vm816, %v784, %v848
        %v881 = vsel %vm817, %v785, %v849
        %v882 = vsel %vm818, %v786, %v850
        %v883 = vsel %vm819, %v787, %v851
        %v884 = vsel %vm820, %v788, %v852
        %v885 = vsel %vm821, %v789, %v853
        %v886 = vsel %vm822, %v790, %v854
        %v887 = vsel %vm823, %v791, %v855
        %v888 = vsel %vm824, %v792, %v856
        %v889 = vsel %vm825, %v793, %v857
        %v890 = vsel %vm826, %v794, %v858
        %v891 = vsel %vm827, %v795, %v859
        %v892 = vsel %vm828, %v796, %v860
        %v893 = vsel %vm829, %v797, %v861
        %v894 = vsel %vm830, %v798, %v862
        %v895 = vsel %vm831, %v799, %v863
        %v896 = vsel %vm832, %v800, %v864
        %v897 = vsel %vm833, %v801, %v865
        %v898 = vsel %vm834, %v802, %v866
        %v899 = vsel %vm835, %v803, %v867
        %v900 = vsel %vm836, %v804, %v868
        %v901 = vsel %vm837, %v805, %v869
        %v902 = vsel %vm838, %v806, %v870
        %v903 = vsel %vm839, %v807, %v871
        %v904 = vsel %vm840, %v808, %v872
        %v905 = vsel %vm841, %v809, %v873
        %v906 = vsel %vm842, %v810, %v874
        %v907 = vsel %vm843, %v811, %v875
        %908 = vst [vmem:[%s257] sm:$0xff] %v876
        %909 = vst [vmem:[%s257 + $0x8] sm:$0xff] %v877
        %910 = vst [vmem:[%s257 + $0x10] sm:$0xff] %v878
        %911 = vst [vmem:[%s257 + $0x18] sm:$0xff] %v879
        %912 = vst [vmem:[%s257 + $0x20] sm:$0xff] %v880
        %913 = vst [vmem:[%s257 + $0x28] sm:$0xff] %v881
        %914 = vst [vmem:[%s257 + $0x30] sm:$0xff] %v882
        %915 = vst [vmem:[%s257 + $0x38] sm:$0xff] %v883
        %916 = vst [vmem:[%s257 + $0x40] sm:$0xff] %v884
        %917 = vst [vmem:[%s257 + $0x48] sm:$0xff] %v885
        %918 = vst [vmem:[%s257 + $0x50] sm:$0xff] %v886
        %919 = vst [vmem:[%s257 + $0x58] sm:$0xff] %v887
        %920 = vst [vmem:[%s257 + $0x60] sm:$0xff] %v888
        %921 = vst [vmem:[%s257 + $0x68] sm:$0xff] %v889
        %922 = vst [vmem:[%s257 + $0x70] sm:$0xff] %v890
        %923 = vst [vmem:[%s257 + $0x78] sm:$0xff] %v891
        %924 = vst [vmem:[%s257 + $0x80] sm:$0xff] %v892
        %925 = vst [vmem:[%s257 + $0x88] sm:$0xff] %v893
        %926 = vst [vmem:[%s257 + $0x90] sm:$0xff] %v894
        %927 = vst [vmem:[%s257 + $0x98] sm:$0xff] %v895
        %928 = vst [vmem:[%s257 + $0xa0] sm:$0xff] %v896
        %929 = vst [vmem:[%s257 + $0xa8] sm:$0xff] %v897
        %930 = vst [vmem:[%s257 + $0xb0] sm:$0xff] %v898
        %931 = vst [vmem:[%s257 + $0xb8] sm:$0xff] %v899
        %932 = vst [vmem:[%s257 + $0xc0] sm:$0xff] %v900
        %933 = vst [vmem:[%s257 + $0xc8] sm:$0xff] %v901
        %934 = vst [vmem:[%s257 + $0xd0] sm:$0xff] %v902
        %935 = vst [vmem:[%s257 + $0xd8] sm:$0xff] %v903
        %936 = vst [vmem:[%s257 + $0xe0] sm:$0xff] %v904
        %937 = vst [vmem:[%s257 + $0xe8] sm:$0xff] %v905
        %938 = vst [vmem:[%s257 + $0xf0] sm:$0xff] %v906
        %939 = vst [vmem:[%s257 + $0xf8] sm:$0xff] %v907
      $region40: #{convolutional_layer.1} parent=31 // pred_fallthru
        _
      %s940 = smul.u32 32, %s19
      %p941 = scmp.lt.s32.totalorder %s940, 63
      %s942 = scalar_select %p941, %s940, 63
      %p943 = scmp.lt.s32.totalorder %s20, 0
      %s944 = scalar_select %p943, %s20, 0
      %s945 = sadd.s32 %s944, %s942
      %s946 = smul.addr %s945, 8
      %s947 = scalar_lea.vmem %s3, %s946
      // Predicated region
      $region41: #{convolutional_layer.1} parent=31 // pred_check
        %p948 = pneg %p135
      $region42: #{convolutional_layer.1} parent=31 // pred_check_branch
        %950 = sbr.rel (%p948) target = $region44
      $region43: #{convolutional_layer.1} parent=31 // pred_region
        %s951 = smul.u32 32, %s19
      $region44: #{convolutional_layer.1} parent=31 // pred_fallthru
        _
    $region32: #{convolutional_layer.1} parent=5 // pred_fallthru
      _
    %p952 = scmp.le.s32.totalorder 2, %s9
    // Predicated region
    $region45: #{convolutional_layer.1} parent=5 // pred_check
      %p953 = pneg %p952
    $region46: #{convolutional_layer.1} parent=5 // pred_check_branch
      %955 = sbr.rel (%p953) target = $region48
    $region47: #{convolutional_layer.1} parent=5 // pred_region
      %s956 = ssub.s32 %s9, 2
      // Predicated region
      $region49: #{convolutional_layer.1} parent=47 // pred_check
        %p957 = pneg %p141
      $region50: #{convolutional_layer.1} parent=47 // pred_check_branch
        %959 = sbr.rel (%p957) target = $region52
      $region51: #{convolutional_layer.1} parent=47 // pred_region
        %s960 = smul.u32 32, %s22
        %p961 = scmp.lt.s32.totalorder %s960, 63
        %s962 = scalar_select %p961, %s960, 63
        %p963 = scmp.lt.s32.totalorder %s23, 0
        %s964 = scalar_select %p963, %s23, 0
        %s965 = sadd.s32 %s964, %s962
        %s966 = smul.addr %s965, 8
        %s967 = scalar_lea.vmem %s3, %s966
      $region52: #{convolutional_layer.1} parent=47 // pred_fallthru
        _
    $region48: #{convolutional_layer.1} parent=5 // pred_fallthru
      _
  $region6: #{convolutional_layer.1} parent=0 // loop_footer
    %s13 = sadd.s32 1, %s9
  $region7: #{convolutional_layer.1} parent=0 // loop_footer_branch
    %8 = sbr.rel target = $region3
  $region8: #{convolutional_layer.1} parent=0 // loop_exit
    _

</llo_original>
